<compile_context>
chip_gen: v7x
topology: tpu7x:2x2x1
jax: 0.10.0
libtpu: 0.0.40
codegen_flags: <defaults>
</compile_context>

<pallas_src>
import functools

import jax
import jax.numpy as jnp
from jax.experimental import pallas as pl
from jax.experimental.pallas import tpu as pltpu


# ---------------------------------------------------------------------------
# Kernel 1: K/V projection (hoisted out of the per-q-tile attention kernel).
# One full-width matmul [tn, in_dim] @ [in_dim, 2*dim]; outputs written
# head-major [B, H, N, d] in bf16 so the attention kernel never lane-slices.
# ---------------------------------------------------------------------------
def _kv_proj_kernel(xb_ref, wkv_ref, k_out_ref, v_out_ref, *, heads, dim):
    d = dim // heads
    xb = xb_ref[0].astype(jnp.bfloat16)                              # [tn, in_dim]
    kv = jnp.dot(xb, wkv_ref[...],
                 preferred_element_type=jnp.float32).astype(jnp.bfloat16)  # [tn, 2*dim]
    for h in range(heads):                  # static slices; paid once per tile
        k_out_ref[0, h] = kv[:, h * d:(h + 1) * d]
        v_out_ref[0, h] = kv[:, dim + h * d:dim + (h + 1) * d]


# ---------------------------------------------------------------------------
# Kernel 2: fused Q projection + flash-style attention + output projection.
# grid = (B, q-tiles, kv-tiles).  B and q-tile axes are "parallel" (no
# cross-tile dependency since K/V are precomputed); kv axis is "arbitrary"
# and drives the online-softmax accumulation in VMEM scratch.
# ---------------------------------------------------------------------------
def _cross_attn_kernel(xa_ref, k_ref, v_ref, wq_ref, wo_ref, bo_ref, o_ref,
                       q_scr, acc_scr, m_scr, l_scr, *, heads):
    kv = pl.program_id(2)
    d = k_ref.shape[-1]

    @pl.when(kv == 0)
    def _():
        # Init online-softmax state and project Q once per (batch, q-tile).
        # The softmax scale is pre-folded into wq in the wrapper.
        m_scr[...] = jnp.full(m_scr.shape, -jnp.inf, dtype=m_scr.dtype)
        l_scr[...] = jnp.zeros(l_scr.shape, dtype=l_scr.dtype)
        acc_scr[...] = jnp.zeros(acc_scr.shape, dtype=acc_scr.dtype)
        q = jnp.dot(xa_ref[0].astype(jnp.bfloat16), wq_ref[...],
                    preferred_element_type=jnp.float32).astype(jnp.bfloat16)
        for h in range(heads):              # head split paid once per q-tile
            q_scr[h] = q[:, h * d:(h + 1) * d]

    qh = q_scr[...]                          # [H, tq,  d] bf16
    kh = k_ref[0]                            # [H, tkv, d] bf16
    vh = v_ref[0]                            # [H, tkv, d] bf16

    # scores: contract the last dims directly (no explicit k.T / XLU transpose)
    s = jnp.einsum('hqd,hkd->hqk', qh, kh,
                   preferred_element_type=jnp.float32)          # [H, tq, tkv]
    m_prev = m_scr[...]
    m_new = jnp.maximum(m_prev, s.max(axis=-1, keepdims=True))
    alpha = jnp.exp(m_prev - m_new)
    p = jnp.exp(s - m_new)
    l_scr[...] = alpha * l_scr[...] + p.sum(axis=-1, keepdims=True)
    acc_scr[...] = alpha * acc_scr[...] + jnp.einsum(
        'hqk,hkd->hqd', p.astype(jnp.bfloat16), vh,
        preferred_element_type=jnp.float32)
    m_scr[...] = m_new

    @pl.when(kv == pl.num_programs(2) - 1)
    def _():
        # Normalize the accumulated PV output (N-free) rather than the [tq, N]
        # probability matrix; reciprocal is now so cheap we use the exact form.
        out_h = acc_scr[...] * pl.reciprocal(l_scr[...], approx=False)  # [H,tq,d]
        attn_out = jnp.concatenate([out_h[h] for h in range(heads)],
                                   axis=-1)                             # [tq,dim]
        out = jnp.dot(attn_out.astype(jnp.bfloat16), wo_ref[...],
                      preferred_element_type=jnp.float32) + bo_ref[...]
        o_ref[0] = out.astype(o_ref.dtype)


def cross_modal_attention(x_a, x_b, w_q, w_kv, w_out, b_out, *, heads,
                          q_block=256, kv_block=512, n_block=512):
    """x_a, x_b: [B, N, in_dim]; w_q: [in_dim, dim]; w_kv: [in_dim, 2*dim];
    w_out: [dim, dim]; b_out: [dim].  Returns {'x_a': x_a, 'x_b': out}."""
    B, N, in_dim = x_a.shape
    dim = w_q.shape[1]
    assert dim % heads == 0
    d = dim // heads
    scale = float(dim) ** (-0.5)            # matches the PyTorch module: dim**-0.5

    # One-time weight prep (free: reused across the whole grid): bf16 weights,
    # softmax scale folded into W_q, bias kept f32 for the exact add.
    wq16 = (w_q * scale).astype(jnp.bfloat16)
    wkv16 = w_kv.astype(jnp.bfloat16)       # passed whole; sliced in-kernel
    wo16 = w_out.astype(jnp.bfloat16)
    bo = b_out.reshape(1, dim).astype(jnp.float32)

    def _tile(n, blk):
        t = min(blk, n)
        assert n % t == 0, "sequence length must be divisible by the tile size"
        return t

    tn = _tile(N, n_block)
    tq = _tile(N, q_block)
    tkv = _tile(N, kv_block)

    # ---- K/V projection: head-major bf16 K/V in HBM ------------------------
    k, v = pl.pallas_call(
        functools.partial(_kv_proj_kernel, heads=heads, dim=dim),
        out_shape=(jax.ShapeDtypeStruct((B, heads, N, d), jnp.bfloat16),
                   jax.ShapeDtypeStruct((B, heads, N, d), jnp.bfloat16)),
        grid_spec=pltpu.PrefetchScalarGridSpec(
            num_scalar_prefetch=0,
            grid=(B, N // tn),
            in_specs=[
                pl.BlockSpec((1, tn, in_dim), lambda b, nt: (b, nt, 0)),
                pl.BlockSpec((in_dim, 2 * dim), lambda b, nt: (0, 0),
                             pipeline_mode=pl.Buffered(1)),   # constant block
            ],
            out_specs=[
                pl.BlockSpec((1, heads, tn, d), lambda b, nt: (b, 0, nt, 0)),
                pl.BlockSpec((1, heads, tn, d), lambda b, nt: (b, 0, nt, 0)),
            ],
        ),
        compiler_params=pltpu.CompilerParams(
            dimension_semantics=("parallel", "parallel"),
            vmem_limit_bytes=64 * 1024 * 1024),
    )(x_b, wkv16)

    # ---- fused Q projection + flash attention + output projection ----------
    flops = (2 * B * N * in_dim * dim        # Q projection
             + 4 * B * N * N * dim           # QK^T + PV
             + 2 * B * N * dim * dim)        # output projection
    bytes_accessed = (B * N * in_dim * 4                      # x_a
                      + 2 * B * heads * N * d * 2             # K, V (bf16)
                      + (in_dim * dim + dim * dim) * 2        # weights (bf16)
                      + dim * 4                               # bias
                      + B * N * dim * 4)                      # output

    out = pl.pallas_call(
        functools.partial(_cross_attn_kernel, heads=heads),
        out_shape=jax.ShapeDtypeStruct((B, N, dim), x_a.dtype),
        grid_spec=pltpu.PrefetchScalarGridSpec(
            num_scalar_prefetch=0,
            grid=(B, N // tq, N // tkv),
            in_specs=[
                pl.BlockSpec((1, tq, in_dim), lambda b, qi, ki: (b, qi, 0)),
                pl.BlockSpec((1, heads, tkv, d), lambda b, qi, ki: (b, 0, ki, 0)),
                pl.BlockSpec((1, heads, tkv, d), lambda b, qi, ki: (b, 0, ki, 0)),
                pl.BlockSpec((in_dim, dim), lambda b, qi, ki: (0, 0),
                             pipeline_mode=pl.Buffered(1)),   # w_q (constant)
                pl.BlockSpec((dim, dim), lambda b, qi, ki: (0, 0),
                             pipeline_mode=pl.Buffered(1)),   # w_out (constant)
                pl.BlockSpec((1, dim), lambda b, qi, ki: (0, 0),
                             pipeline_mode=pl.Buffered(1)),   # b_out (constant)
            ],
            out_specs=pl.BlockSpec((1, tq, dim), lambda b, qi, ki: (b, qi, 0)),
            scratch_shapes=[
                pltpu.VMEM((heads, tq, d), jnp.bfloat16),     # Q (head-major)
                pltpu.VMEM((heads, tq, d), jnp.float32),      # PV accumulator
                pltpu.VMEM((heads, tq, 1), jnp.float32),      # running max
                pltpu.VMEM((heads, tq, 1), jnp.float32),      # running denom
            ],
        ),
        compiler_params=pltpu.CompilerParams(
            dimension_semantics=("parallel", "parallel", "arbitrary"),
            vmem_limit_bytes=64 * 1024 * 1024),
        cost_estimate=pl.CostEstimate(
            flops=flops,
            transcendentals=B * heads * N * N,
            bytes_accessed=bytes_accessed),
    )(x_a, k, v, wq16, wo16, bo)

    return {'x_a': x_a, 'x_b': out}


def _reference(x_a, x_b, w_q, w_kv, w_out, b_out, heads):
    """Pure-JAX f32 reference mirroring the PyTorch forward exactly."""
    B, N, _ = x_a.shape
    dim = w_q.shape[1]
    d = dim // heads
    scale = float(dim) ** (-0.5)
    q = x_a @ w_q                                       # [B, N, dim]
    kv = x_b @ w_kv                                     # [B, N, 2*dim]
    qkv = jnp.concatenate([q, kv], axis=-1)             # [B, N, 3*dim]
    qkv = qkv.reshape(B, N, 3, heads, d).transpose(2, 0, 3, 1, 4)  # [3,B,H,N,d]
    q, k, v = qkv[0], qkv[1], qkv[2]
    dots = jnp.einsum('bhid,bhjd->bhij', q, k) * scale
    attn = jax.nn.softmax(dots, axis=-1)
    out = jnp.einsum('bhij,bhjd->bhid', attn, v)
    out = out.transpose(0, 2, 1, 3).reshape(B, N, dim)  # 'b h n d -> b n (h d)'
    return out @ w_out + b_out


if __name__ == "__main__":
    B, N, in_dim, dim, heads = 2, 8, 32, 32, 4

    key = jax.random.PRNGKey(0)
    k1, k2, k3, k4, k5, k6 = jax.random.split(key, 6)
    x_a = jax.random.normal(k1, (B, N, in_dim), dtype=jnp.float32)
    x_b = jax.random.normal(k2, (B, N, in_dim), dtype=jnp.float32)
    # deterministic "linear layer" params (W stored as [in, out] == torch W.T)
    w_q = jax.random.normal(k3, (in_dim, dim), dtype=jnp.float32) * 0.1
    w_kv = jax.random.normal(k4, (in_dim, 2 * dim), dtype=jnp.float32) * 0.1
    w_out = jax.random.normal(k5, (dim, dim), dtype=jnp.float32) * 0.1
    b_out = jax.random.normal(k6, (dim,), dtype=jnp.float32) * 0.1

    result = cross_modal_attention(x_a, x_b, w_q, w_kv, w_out, b_out, heads=heads)
    jax.block_until_ready(result['x_b'])

    ref = _reference(x_a, x_b, w_q, w_kv, w_out, b_out, heads)
    # bf16 matmul operands (f32 accumulation) -> relaxed tolerance vs f32 ref.
    assert jnp.allclose(result['x_b'], ref, atol=2e-2, rtol=2e-2), \
        "mismatch vs reference"
    assert jnp.array_equal(result['x_a'], x_a)

    print("KERNEL_OK")
</pallas_src>

<mosaic_0001>
module attributes {stable_mosaic.version = 11 : i64} {
  func.func @_kv_proj_kernel(%arg0: i32, %arg1: i32, %arg2: memref<1x8x32xf32, #tpu.memory_space<vmem>>, %arg3: memref<32x64xbf16, #tpu.memory_space<vmem>>, %arg4: memref<1x4x8x8xbf16, #tpu.memory_space<vmem>>, %arg5: memref<1x4x8x8xbf16, #tpu.memory_space<vmem>>) attributes {dimension_semantics = [#tpu.dimension_semantics<parallel>, #tpu.dimension_semantics<parallel>], iteration_bounds = array<i64: 2, 1>, scalar_prefetch = 0 : i64, scratch_operands = 0 : i64, tpu.core_type = #tpu.core_type<tc>, window_params = [{transform_indices = @transform_0, window_bounds = array<i64: 1, 8, 32>}, {pipeline_mode = #tpu.pipeline_mode<synchronous>, transform_indices = @transform_1, window_bounds = array<i64: 32, 64>}, {transform_indices = @transform_2, window_bounds = array<i64: 1, 4, 8, 8>}, {transform_indices = @transform_3, window_bounds = array<i64: 1, 4, 8, 8>}]} {
    %c0 = arith.constant 0 : index
    %c0_0 = arith.constant 0 : index
    %c0_1 = arith.constant 0 : index
    %0 = vector.load %arg2[%c0, %c0_0, %c0_1] : memref<1x8x32xf32, #tpu.memory_space<vmem>>, vector<1x8x32xf32>
    %1 = vector.shape_cast %0 : vector<1x8x32xf32> to vector<8x32xf32>
    %2 = arith.truncf %1 : vector<8x32xf32> to vector<8x32xbf16>
    %c0_2 = arith.constant 0 : index
    %c0_3 = arith.constant 0 : index
    %3 = vector.load %arg3[%c0_2, %c0_3] : memref<32x64xbf16, #tpu.memory_space<vmem>>, vector<32x64xbf16>
    %cst = arith.constant dense<0.000000e+00> : vector<8x64xf32>
    %4 = tpu.matmul %2, %3, %cst {dimension_numbers = #tpu.dot_dimension_numbers<[1], [0], [0], [1], [0, 0, 1, 1], [], []>} : vector<8x32xbf16>, vector<32x64xbf16>, vector<8x64xf32> -> vector<8x64xf32>
    %5 = arith.truncf %4 : vector<8x64xf32> to vector<8x64xbf16>
    %6 = vector.extract_strided_slice %5 {offsets = [0, 0], sizes = [8, 8], strides = [1, 1]} : vector<8x64xbf16> to vector<8x8xbf16>
    %c0_4 = arith.constant 0 : index
    %c0_5 = arith.constant 0 : index
    %c0_6 = arith.constant 0 : index
    %c0_7 = arith.constant 0 : index
    %7 = vector.load %arg4[%c0_4, %c0_5, %c0_6, %c0_7] : memref<1x4x8x8xbf16, #tpu.memory_space<vmem>>, vector<1x1x8x8xbf16>
    %8 = vector.shape_cast %7 : vector<1x1x8x8xbf16> to vector<8x8xbf16>
    %9 = vector.shape_cast %6 : vector<8x8xbf16> to vector<1x1x8x8xbf16>
    tpu.vector_store %arg4[%c0_4, %c0_5, %c0_6, %c0_7], %9 {strides = array<i32>} : memref<1x4x8x8xbf16, #tpu.memory_space<vmem>>, vector<1x1x8x8xbf16>,
    %10 = vector.extract_strided_slice %5 {offsets = [0, 32], sizes = [8, 8], strides = [1, 1]} : vector<8x64xbf16> to vector<8x8xbf16>
    %c0_8 = arith.constant 0 : index
    %c0_9 = arith.constant 0 : index
    %c0_10 = arith.constant 0 : index
    %c0_11 = arith.constant 0 : index
    %11 = vector.load %arg5[%c0_8, %c0_9, %c0_10, %c0_11] : memref<1x4x8x8xbf16, #tpu.memory_space<vmem>>, vector<1x1x8x8xbf16>
    %12 = vector.shape_cast %11 : vector<1x1x8x8xbf16> to vector<8x8xbf16>
    %13 = vector.shape_cast %10 : vector<8x8xbf16> to vector<1x1x8x8xbf16>
    tpu.vector_store %arg5[%c0_8, %c0_9, %c0_10, %c0_11], %13 {strides = array<i32>} : memref<1x4x8x8xbf16, #tpu.memory_space<vmem>>, vector<1x1x8x8xbf16>,
    %14 = vector.extract_strided_slice %5 {offsets = [0, 8], sizes = [8, 8], strides = [1, 1]} : vector<8x64xbf16> to vector<8x8xbf16>
    %c0_12 = arith.constant 0 : index
    %c1 = arith.constant 1 : index
    %c0_13 = arith.constant 0 : index
    %c0_14 = arith.constant 0 : index
    %15 = vector.load %arg4[%c0_12, %c1, %c0_13, %c0_14] : memref<1x4x8x8xbf16, #tpu.memory_space<vmem>>, vector<1x1x8x8xbf16>
    %16 = vector.shape_cast %15 : vector<1x1x8x8xbf16> to vector<8x8xbf16>
    %17 = vector.shape_cast %14 : vector<8x8xbf16> to vector<1x1x8x8xbf16>
    tpu.vector_store %arg4[%c0_12, %c1, %c0_13, %c0_14], %17 {strides = array<i32>} : memref<1x4x8x8xbf16, #tpu.memory_space<vmem>>, vector<1x1x8x8xbf16>,
    %18 = vector.extract_strided_slice %5 {offsets = [0, 40], sizes = [8, 8], strides = [1, 1]} : vector<8x64xbf16> to vector<8x8xbf16>
    %c0_15 = arith.constant 0 : index
    %c1_16 = arith.constant 1 : index
    %c0_17 = arith.constant 0 : index
    %c0_18 = arith.constant 0 : index
    %19 = vector.load %arg5[%c0_15, %c1_16, %c0_17, %c0_18] : memref<1x4x8x8xbf16, #tpu.memory_space<vmem>>, vector<1x1x8x8xbf16>
    %20 = vector.shape_cast %19 : vector<1x1x8x8xbf16> to vector<8x8xbf16>
    %21 = vector.shape_cast %18 : vector<8x8xbf16> to vector<1x1x8x8xbf16>
    tpu.vector_store %arg5[%c0_15, %c1_16, %c0_17, %c0_18], %21 {strides = array<i32>} : memref<1x4x8x8xbf16, #tpu.memory_space<vmem>>, vector<1x1x8x8xbf16>,
    %22 = vector.extract_strided_slice %5 {offsets = [0, 16], sizes = [8, 8], strides = [1, 1]} : vector<8x64xbf16> to vector<8x8xbf16>
    %c0_19 = arith.constant 0 : index
    %c2 = arith.constant 2 : index
    %c0_20 = arith.constant 0 : index
    %c0_21 = arith.constant 0 : index
    %23 = vector.load %arg4[%c0_19, %c2, %c0_20, %c0_21] : memref<1x4x8x8xbf16, #tpu.memory_space<vmem>>, vector<1x1x8x8xbf16>
    %24 = vector.shape_cast %23 : vector<1x1x8x8xbf16> to vector<8x8xbf16>
    %25 = vector.shape_cast %22 : vector<8x8xbf16> to vector<1x1x8x8xbf16>
    tpu.vector_store %arg4[%c0_19, %c2, %c0_20, %c0_21], %25 {strides = array<i32>} : memref<1x4x8x8xbf16, #tpu.memory_space<vmem>>, vector<1x1x8x8xbf16>,
    %26 = vector.extract_strided_slice %5 {offsets = [0, 48], sizes = [8, 8], strides = [1, 1]} : vector<8x64xbf16> to vector<8x8xbf16>
    %c0_22 = arith.constant 0 : index
    %c2_23 = arith.constant 2 : index
    %c0_24 = arith.constant 0 : index
    %c0_25 = arith.constant 0 : index
    %27 = vector.load %arg5[%c0_22, %c2_23, %c0_24, %c0_25] : memref<1x4x8x8xbf16, #tpu.memory_space<vmem>>, vector<1x1x8x8xbf16>
    %28 = vector.shape_cast %27 : vector<1x1x8x8xbf16> to vector<8x8xbf16>
    %29 = vector.shape_cast %26 : vector<8x8xbf16> to vector<1x1x8x8xbf16>
    tpu.vector_store %arg5[%c0_22, %c2_23, %c0_24, %c0_25], %29 {strides = array<i32>} : memref<1x4x8x8xbf16, #tpu.memory_space<vmem>>, vector<1x1x8x8xbf16>,
    %30 = vector.extract_strided_slice %5 {offsets = [0, 24], sizes = [8, 8], strides = [1, 1]} : vector<8x64xbf16> to vector<8x8xbf16>
    %c0_26 = arith.constant 0 : index
    %c3 = arith.constant 3 : index
    %c0_27 = arith.constant 0 : index
    %c0_28 = arith.constant 0 : index
    %31 = vector.load %arg4[%c0_26, %c3, %c0_27, %c0_28] : memref<1x4x8x8xbf16, #tpu.memory_space<vmem>>, vector<1x1x8x8xbf16>
    %32 = vector.shape_cast %31 : vector<1x1x8x8xbf16> to vector<8x8xbf16>
    %33 = vector.shape_cast %30 : vector<8x8xbf16> to vector<1x1x8x8xbf16>
    tpu.vector_store %arg4[%c0_26, %c3, %c0_27, %c0_28], %33 {strides = array<i32>} : memref<1x4x8x8xbf16, #tpu.memory_space<vmem>>, vector<1x1x8x8xbf16>,
    %34 = vector.extract_strided_slice %5 {offsets = [0, 56], sizes = [8, 8], strides = [1, 1]} : vector<8x64xbf16> to vector<8x8xbf16>
    %c0_29 = arith.constant 0 : index
    %c3_30 = arith.constant 3 : index
    %c0_31 = arith.constant 0 : index
    %c0_32 = arith.constant 0 : index
    %35 = vector.load %arg5[%c0_29, %c3_30, %c0_31, %c0_32] : memref<1x4x8x8xbf16, #tpu.memory_space<vmem>>, vector<1x1x8x8xbf16>
    %36 = vector.shape_cast %35 : vector<1x1x8x8xbf16> to vector<8x8xbf16>
    %37 = vector.shape_cast %34 : vector<8x8xbf16> to vector<1x1x8x8xbf16>
    tpu.vector_store %arg5[%c0_29, %c3_30, %c0_31, %c0_32], %37 {strides = array<i32>} : memref<1x4x8x8xbf16, #tpu.memory_space<vmem>>, vector<1x1x8x8xbf16>,
    return
  }
  func.func @transform_0(%arg0: i32, %arg1: i32) -> (i32, i32, i32) {
    %c0_i32 = arith.constant 0 : i32
    %c0_i32_0 = arith.constant 0 : i32
    return %arg0, %arg1, %c0_i32 : i32, i32, i32
  }
  func.func @transform_1(%arg0: i32, %arg1: i32) -> (i32, i32) {
    %c0_i32 = arith.constant 0 : i32
    %c0_i32_0 = arith.constant 0 : i32
    %c0_i32_1 = arith.constant 0 : i32
    return %c0_i32, %c0_i32_0 : i32, i32
  }
  func.func @transform_2(%arg0: i32, %arg1: i32) -> (i32, i32, i32, i32) {
    %c0_i32 = arith.constant 0 : i32
    %c0_i32_0 = arith.constant 0 : i32
    %c0_i32_1 = arith.constant 0 : i32
    return %arg0, %c0_i32, %arg1, %c0_i32_0 : i32, i32, i32, i32
  }
  func.func @transform_3(%arg0: i32, %arg1: i32) -> (i32, i32, i32, i32) {
    %c0_i32 = arith.constant 0 : i32
    %c0_i32_0 = arith.constant 0 : i32
    %c0_i32_1 = arith.constant 0 : i32
    return %arg0, %c0_i32, %arg1, %c0_i32_0 : i32, i32, i32, i32
  }
}

</mosaic_0001>

<llo_original>
// kernel: tpu_custom_call.1
$region0: #{tpu_custom_call.1}
  #allocation0 [shape = 'u32[]', space=smem, size = 0x4, offset = 0x4, fixed_abs, tag = 'smem constant byte address 0x4 - core index']
  #allocation1 [shape = 'u32[144,128]{1,0:T(1,128)}', space=vmem, size = 0x12000, scoped, tag = 'internal scratch']
  %s0 = inlined_call_operand.hbm [shape: f32[2,8,32], index: 0, kind: input, shape index: {}]
  %s1 = inlined_call_operand.hbm [shape: bf16[32,64], index: 1, kind: input, shape index: {}]
  %s2 = inlined_call_operand.hbm [shape: bf16[2,4,8,8], index: 2, kind: output, shape index: {0}]
  %s3 = inlined_call_operand.hbm [shape: bf16[2,4,8,8], index: 3, kind: output, shape index: {1}]
  %4 = xla_tuple %s2, %s3
  %s5 = sld [smem:[#allocation0]]
  $region57: #{tpu_custom_call.1} parent=0
    _
  %s7 = ssub.s32 1, %s5
  %s8 = scalar_select 0, %s7, %s5
  $region1: #{tpu_custom_call.1} parent=0
    #allocation2 [shape = 'u8[8192]{0}', space=vmem, size = 0x2000, scoped, tag = 'input window, operand 0']
    #allocation3 [shape = 's32[2]{0}', space=sflag, size = 0x8, scoped, tag = 'scoped memory for tpu_custom_call.1']
    #allocation4 [shape = 's32[2]{0}', space=sflag, size = 0x8, scoped, tag = 'scoped memory for tpu_custom_call.1']
    #allocation5 [shape = 'u8[8192]{0}', space=vmem, size = 0x2000, scoped, tag = 'input window, operand 1, single buffered']
    #allocation6 [shape = 's32[1]{0}', space=sflag, size = 0x4, scoped, tag = 'scoped memory for tpu_custom_call.1']
    #allocation7 [shape = 'u8[16384]{0}', space=vmem, size = 0x4000, scoped, tag = 'output window, operand 0']
    #allocation8 [shape = 'u8[16384]{0}', space=vmem, size = 0x4000, scoped, tag = 'output window, operand 1']
    #allocation9 [shape = 's32[2]{0}', space=sflag, size = 0x8, scoped, tag = 'scoped memory for tpu_custom_call.1']
    %9 = vsyncpa [#allocation3], 0
    %s10 = scalar_lea.sflag [#allocation3], 1
    %11 = vsyncpa %s10, 0
    %12 = vsyncpa [#allocation6], 0
    %13 = vsyncpa [#allocation4], 0
    %s14 = scalar_lea.sflag [#allocation4], 1
    %15 = vsyncpa %s14, 0
    %16 = vsyncpa [#allocation9], 0
    %s17 = scalar_lea.sflag [#allocation9], 1
    %18 = vsyncpa %s17, 0
    loop: start=0, step=1, limit=4
    $region2: #{tpu_custom_call.1} parent=1 // loop_pre_header
      _
    $region3: #{tpu_custom_call.1} parent=1 // loop_header
      %s20 = sphi 0, %s24
      %p21 = scmp.ge.s32.totalorder %s20, 4
      %s27 = sphi 0, %s39
      %s28 = sphi 0, %s35
      %s29 = sphi 0, %s27
      %s30 = sphi 0, %s28
      %s31 = sphi 0, %s29
      %s32 = sphi 0, %s30
      %s44 = sphi 0, %s46
      %s47 = sphi 0, %s44
      %s48 = sphi 0, %s47
      %s64 = sphi 0, %s48
      %s68 = sphi 0, %s68
      %s70 = sphi 0, %s68
      %s71 = sphi 0, %s70
      %s85 = sphi 0, %s71
      %s93 = sphi 0, %s95
      %s96 = sphi 0, %s93
      %s97 = sphi 0, %s96
      %s113 = sphi 0, %s97
      %s121 = sphi 0, %s123
      %s124 = sphi 0, %s121
      %s125 = sphi 0, %s124
      %s141 = sphi 0, %s125
    $region4: #{tpu_custom_call.1} parent=1 // loop_header_branch
      %23 = sbr.rel (%p21) target = $region8
    $region5: #{tpu_custom_call.1} parent=1 // loop_body
      %s25 = ssub.s32 %s20, 1
      %s26 = ssub.s32 %s20, 2
      %s33 = sadd.s32 1, %s28
      %p34 = scmp.ge.s32.totalorder %s33, 1
      %s35 = scalar_select %p34, 0, %s33
      %s36 = sadd.s32 1, %s27
      %s37 = scalar_select %p34, %s36, %s27
      %p38 = scmp.ge.s32.totalorder %s37, 2
      %s39 = scalar_select %p38, 0, %s37
      %s40 = ssub.s32 %s27, %s39
      %s41 = ssub.s32 %s28, %s35
      %s42 = sor.u32 %s40, %s41
      %p43 = scmp.eq.s32.totalorder %s42, 0
      %s45 = sadd.s32 %s44, 1
      %s46 = scalar_select %p43, %s44, %s45
      %p49 = pneg %p43
      %p50 = scmp.eq.s32.totalorder %s20, 1
      %p51 = por %p49, %p50
      %p52 = scmp.ne.s32.totalorder %s44, %s47
      %p53 = scmp.eq.s32.totalorder %s20, 0
      %p54 = por %p52, %p53
      %p55 = scmp.ne.s32.totalorder %s44, %s47
      %p56 = scmp.eq.s32.totalorder %s25, 1
      %p57 = por %p55, %p56
      %p58 = scmp.ne.s32.totalorder %s47, %s48
      %p59 = scmp.eq.s32.totalorder %s25, 0
      %p60 = por %p58, %p59
      %p61 = scmp.ne.s32.totalorder %s47, %s48
      %p62 = scmp.eq.s32.totalorder %s26, 1
      %p63 = por %p61, %p62
      %p65 = scmp.ne.s32.totalorder %s48, %s64
      %p66 = scmp.eq.s32.totalorder %s26, 0
      %p67 = por %p65, %p66
      %s69 = sadd.s32 %s68, 1
      %p72 = scmp.eq.s32.totalorder %s20, 1
      %p73 = scmp.ne.s32.totalorder %s68, %s70
      %p74 = scmp.eq.s32.totalorder %s20, 0
      %p75 = por %p73, %p74
      %p76 = scmp.ne.s32.totalorder %s68, %s70
      %p77 = scmp.eq.s32.totalorder %s25, 1
      %p78 = por %p76, %p77
      %p79 = scmp.ne.s32.totalorder %s70, %s71
      %p80 = scmp.eq.s32.totalorder %s25, 0
      %p81 = por %p79, %p80
      %p82 = scmp.ne.s32.totalorder %s70, %s71
      %p83 = scmp.eq.s32.totalorder %s26, 1
      %p84 = por %p82, %p83
      %p86 = scmp.ne.s32.totalorder %s71, %s85
      %p87 = scmp.eq.s32.totalorder %s26, 0
      %p88 = por %p86, %p87
      %s89 = ssub.s32 %s27, %s39
      %s90 = ssub.s32 %s28, %s35
      %s91 = sor.u32 %s89, %s90
      %p92 = scmp.eq.s32.totalorder %s91, 0
      %s94 = sadd.s32 %s93, 1
      %s95 = scalar_select %p92, %s93, %s94
      %p98 = pneg %p92
      %p99 = scmp.eq.s32.totalorder %s20, 1
      %p100 = por %p98, %p99
      %p101 = scmp.ne.s32.totalorder %s93, %s96
      %p102 = scmp.eq.s32.totalorder %s20, 0
      %p103 = por %p101, %p102
      %p104 = scmp.ne.s32.totalorder %s93, %s96
      %p105 = scmp.eq.s32.totalorder %s25, 1
      %p106 = por %p104, %p105
      %p107 = scmp.ne.s32.totalorder %s96, %s97
      %p108 = scmp.eq.s32.totalorder %s25, 0
      %p109 = por %p107, %p108
      %p110 = scmp.ne.s32.totalorder %s96, %s97
      %p111 = scmp.eq.s32.totalorder %s26, 1
      %p112 = por %p110, %p111
      %p114 = scmp.ne.s32.totalorder %s97, %s113
      %p115 = scmp.eq.s32.totalorder %s26, 0
      %p116 = por %p114, %p115
      %s117 = ssub.s32 %s27, %s39
      %s118 = ssub.s32 %s28, %s35
      %s119 = sor.u32 %s117, %s118
      %p120 = scmp.eq.s32.totalorder %s119, 0
      %s122 = sadd.s32 %s121, 1
      %s123 = scalar_select %p120, %s121, %s122
      %p126 = pneg %p120
      %p127 = scmp.eq.s32.totalorder %s20, 1
      %p128 = por %p126, %p127
      %p129 = scmp.ne.s32.totalorder %s121, %s124
      %p130 = scmp.eq.s32.totalorder %s20, 0
      %p131 = por %p129, %p130
      %p132 = scmp.ne.s32.totalorder %s121, %s124
      %p133 = scmp.eq.s32.totalorder %s25, 1
      %p134 = por %p132, %p133
      %p135 = scmp.ne.s32.totalorder %s124, %s125
      %p136 = scmp.eq.s32.totalorder %s25, 0
      %p137 = por %p135, %p136
      %p138 = scmp.ne.s32.totalorder %s124, %s125
      %p139 = scmp.eq.s32.totalorder %s26, 1
      %p140 = por %p138, %p139
      %p142 = scmp.ne.s32.totalorder %s125, %s141
      %p143 = scmp.eq.s32.totalorder %s26, 0
      %p144 = por %p142, %p143
      %p145 = scmp.le.s32.totalorder 1, %s20
      %p146 = scmp.lt.s32.totalorder %s20, 3
      %p147 = pnand %p145, %p146
      %p148 = pneg %p147
      // Predicated region
      $region9: #{tpu_custom_call.1} parent=5 // pred_check
        _
      $region10: #{tpu_custom_call.1} parent=5 // pred_check_branch
        %150 = sbr.rel (%p147) target = $region12
      $region11: #{tpu_custom_call.1} parent=5 // pred_region
        %s151 = ssub.s32 %s20, 1
        // Predicated region
        $region13: #{tpu_custom_call.1} parent=11 // pred_check
          %p152 = pneg %p81
        $region14: #{tpu_custom_call.1} parent=11 // pred_check_branch
          %154 = sbr.rel (%p152) target = $region16
        $region15: #{tpu_custom_call.1} parent=11 // pred_region
          %s156 = ssub.s32 256, 256
          %157 = vsyncadd [#allocation6], %s156
          %s158 = sshll.u32 [#allocation5], 4
          %s159 = int_to_ptr.vmem [resolvable:$true] %s158
          %164 = dma.hbm_to_vmem [thread:$0]  %s1, 256, %s159, [#allocation6], 64, 64, 4
        $region16: #{tpu_custom_call.1} parent=11 // pred_fallthru
          _
      $region12: #{tpu_custom_call.1} parent=5 // pred_fallthru
        _
      %p165 = scmp.lt.s32.totalorder %s20, 2
      // Predicated region
      $region17: #{tpu_custom_call.1} parent=5 // pred_check
        %p166 = pneg %p165
      $region18: #{tpu_custom_call.1} parent=5 // pred_check_branch
        %168 = sbr.rel (%p166) target = $region20
      $region19: #{tpu_custom_call.1} parent=5 // pred_region
        // Predicated region
        $region21: #{tpu_custom_call.1} parent=19 // pred_check
          %p169 = pneg %p54
        $region22: #{tpu_custom_call.1} parent=19 // pred_check_branch
          %171 = sbr.rel (%p169) target = $region24
        $region23: #{tpu_custom_call.1} parent=19 // pred_region
          %s172 = sand.u32 %s44, 1
          %s173 = scalar_lea.sflag [#allocation3], %s172
          %s174 = sand.u32 %s44, 1
          %s175 = smul.addr %s174, 8
          %s176 = scalar_lea.vmem [#allocation2], %s175
          %s178 = ssub.s32 128, 128
          %179 = vsyncadd %s173, %s178
          %s180 = sadd.s32 %s28, %s27
          %s181 = smul.addr %s180, 128
          %s182 = scalar_lea.hbm %s0, %s181
          %s184 = sshll.u32 %s176, 4
          %s185 = int_to_ptr.vmem [resolvable:$true] %s184
          %187 = dma.hbm_to_vmem [thread:$0]  %s182, 128, %s185, %s173
        $region24: #{tpu_custom_call.1} parent=19 // pred_fallthru
          _
      $region20: #{tpu_custom_call.1} parent=5 // pred_fallthru
        _
      %p188 = scmp.le.s32.totalorder 1, %s20
      %p189 = scmp.lt.s32.totalorder %s20, 3
      %p190 = pnand %p188, %p189
      %p191 = pneg %p190
      // Predicated region
      $region25: #{tpu_custom_call.1} parent=5 // pred_check
        _
      $region26: #{tpu_custom_call.1} parent=5 // pred_check_branch
        %193 = sbr.rel (%p190) target = $region28
      $region27: #{tpu_custom_call.1} parent=5 // pred_region
        %s194 = ssub.s32 %s20, 1
        %s195 = sand.u32 %s47, 1
        %s196 = scalar_lea.sflag [#allocation3], %s195
        %s197 = sand.u32 %s47, 1
        %s198 = smul.addr %s197, 8
        %s199 = scalar_lea.vmem [#allocation2], %s198
        // Predicated region
        $region29: #{tpu_custom_call.1} parent=27 // pred_check
          %p200 = pneg %p60
        $region30: #{tpu_custom_call.1} parent=27 // pred_check_branch
          %202 = sbr.rel (%p200) target = $region32
        $region31: #{tpu_custom_call.1} parent=27 // pred_region
          %203 = dma.done %s196, 128
        $region32: #{tpu_custom_call.1} parent=27 // pred_fallthru
          _
        // Predicated region
        $region33: #{tpu_custom_call.1} parent=27 // pred_check
          %p204 = pneg %p81
        $region34: #{tpu_custom_call.1} parent=27 // pred_check_branch
          %206 = sbr.rel (%p204) target = $region36
        $region35: #{tpu_custom_call.1} parent=27 // pred_region
          %207 = dma.done [#allocation6], 256
        $region36: #{tpu_custom_call.1} parent=27 // pred_fallthru
          _
        %s208 = sand.u32 %s47, 1
        %s209 = scalar_lea.sflag [#allocation3], %s208
        %s210 = sand.u32 %s47, 1
        %s211 = smul.addr %s210, 8
        %s212 = scalar_lea.vmem [#allocation2], %s211
        %p213 = pneg %p60
        %p214 = pneg %p57
        %p215 = pneg %p81
        %p216 = pneg %p78
        %p217 = pneg %p109
        %p218 = pneg %p106
        %s219 = sand.u32 %s96, 1
        %s220 = scalar_lea.sflag [#allocation4], %s219
        %s221 = sand.u32 %s96, 1
        %s222 = smul.addr %s221, 16
        %s223 = scalar_lea.vmem [#allocation7], %s222
        %p224 = pneg %p137
        %p225 = pneg %p134
        %s226 = sand.u32 %s124, 1
        %s227 = scalar_lea.sflag [#allocation9], %s226
        %s228 = sand.u32 %s124, 1
        %s229 = smul.addr %s228, 16
        %s230 = scalar_lea.vmem [#allocation8], %s229
        %v232 = vld [vmem:[%s199] sm:$0xff]
        %v233 = vpack.c.bf16 %v232, %v232
        %v234 = vld [vmem:[#allocation5] sm:$0xf]
        %v235 = vld [vmem:[#allocation5 + $0x4] sm:$0xf]
        %v236 = vld [vmem:[#allocation5 + $0x8] sm:$0xf]
        %v237 = vld [vmem:[#allocation5 + $0xc] sm:$0xf]
        %v242 = vunpack.c.l.b16 %v234
        %v243 = vunpack.c.l.b16 %v235
        %v244 = vunpack.c.l.b16 %v236
        %v245 = vunpack.c.l.b16 %v237
        %v246 = vpack.c.b16 %v243, %v242
        %v247 = vpack.c.b16 %v245, %v244
        %vm250 = vcmask 261120
        %v252 = vsel %vm250, %v233, 0
        %254 = vmatprep.subr.bf16.mxu0 0
        %255 = vmatpush1.bf16.msra.mxu0 %v246
        %256 = vmatprep.subr.bf16.mxu0 0
        %257 = vmatpush1.bf16.msra.mxu0 %v247
        %258 = vmatprep.subr.bf16.mxu0 0
        %259 = vmatpush1.bf16.msra.mxu0 0
        %260 = vmatprep.subr.bf16.mxu0 0
        %261 = vmatpush1.bf16.msra.mxu0 0
        %262 = vmatprep.subr.bf16.mxu0 0
        %263 = vmatpush1.bf16.msra.mxu0 0
        %264 = vmatprep.subr.bf16.mxu0 0
        %265 = vmatpush1.bf16.msra.mxu0 0
        %266 = vmatprep.subr.bf16.mxu0 0
        %267 = vmatpush1.bf16.msra.mxu0 0
        %268 = vmatprep.subr.bf16.mxu0 0
        %269 = vmatpush1.bf16.msra.mxu0 0
        %270 = vmatprep.subr.bf16.mxu0 0
        %271 = vmatpush1.bf16.msra.mxu0 0
        %272 = vmatprep.subr.bf16.mxu0 0
        %273 = vmatpush1.bf16.msra.mxu0 0
        %274 = vmatprep.subr.bf16.mxu0 0
        %275 = vmatpush1.bf16.msra.mxu0 0
        %276 = vmatprep.subr.bf16.mxu0 0
        %277 = vmatpush1.bf16.msra.mxu0 0
        %278 = vmatprep.subr.bf16.mxu0 0
        %279 = vmatpush1.bf16.msra.mxu0 0
        %280 = vmatprep.subr.bf16.mxu0 0
        %281 = vmatpush1.bf16.msra.mxu0 0
        %282 = vmatprep.subr.bf16.mxu0 0
        %283 = vmatpush1.bf16.msra.mxu0 0
        %284 = vmatprep.subr.bf16.mxu0 0
        %285 = vmatpush1.bf16.msra.mxu0 0
        %286 = vmatprep.mubr.bf16.mxu0 0
        %287 = vmatmul.mubr.bf16.gmra.mrb[0].mxu0 %v252
        %v288 = vpop.f32.mrb[0].mxu0
        %v289 = vadd.f32 0.0, %v288
        %v290 = vpop.f32.mrb[0].mxu0
        %v291 = vpop.f32.mrb[0].mxu0
        %v292 = vpop.f32.mrb[0].mxu0
        %293 = vdwg.mxu0
        %v294 = vpack.c.bf16 %v289, %v289
        %vm295 = vcmask 60416
        %296 = vst.msk [vmem:[%s223] sm:$0xf] %vm295, %v294
        %v298 = vunpack.c.l.b16 %v294
        %v299 = vpack.c.b16 %v298, %v298
        %300 = vrot.lane.b32.xlu0 %v299, 96
        %v301 = vpop.permute.xlu0 %300
        %303 = vst.msk [vmem:[%s230] sm:$0xf] %vm295, %v301
        %304 = vrot.lane.b32.xlu0 %v299, 120
        %v305 = vpop.permute.xlu0 %304
        %s307 = scalar_lea.vmem %s223, 4 [#allocation7]
        %308 = vst.msk [vmem:[%s307] sm:$0xf] %vm295, %v305
        %309 = vrot.lane.b32.xlu0 %v299, 88
        %v310 = vpop.permute.xlu0 %309
        %s312 = scalar_lea.vmem %s230, 4 [#allocation8]
        %313 = vst.msk [vmem:[%s312] sm:$0xf] %vm295, %v310
        %314 = vrot.lane.b32.xlu0 %v299, 112
        %v315 = vpop.permute.xlu0 %314
        %s317 = scalar_lea.vmem %s223, 8 [#allocation7]
        %318 = vst.msk [vmem:[%s317] sm:$0xf] %vm295, %v315
        %319 = vrot.lane.b32.xlu0 %v299, 80
        %v320 = vpop.permute.xlu0 %319
        %s322 = scalar_lea.vmem %s230, 8 [#allocation8]
        %323 = vst.msk [vmem:[%s322] sm:$0xf] %vm295, %v320
        %324 = vrot.lane.b32.xlu0 %v299, 104
        %v325 = vpop.permute.xlu0 %324
        %s327 = scalar_lea.vmem %s223, 12 [#allocation7]
        %328 = vst.msk [vmem:[%s327] sm:$0xf] %vm295, %v325
        %329 = vrot.lane.b32.xlu0 %v299, 72
        %v330 = vpop.permute.xlu0 %329
        %s332 = scalar_lea.vmem %s230, 12 [#allocation8]
        %333 = vst.msk [vmem:[%s332] sm:$0xf] %vm295, %v330
        %s334 = sand.u32 %s96, 1
        %s335 = scalar_lea.sflag [#allocation4], %s334
        %s336 = sand.u32 %s96, 1
        %s337 = smul.addr %s336, 16
        %s338 = scalar_lea.vmem [#allocation7], %s337
        %s339 = sand.u32 %s124, 1
        %s340 = scalar_lea.sflag [#allocation9], %s339
        %s341 = sand.u32 %s124, 1
        %s342 = smul.addr %s341, 16
        %s343 = scalar_lea.vmem [#allocation8], %s342
        // Predicated region
        $region37: #{tpu_custom_call.1} parent=27 // pred_check
          %p344 = pneg %p106
        $region38: #{tpu_custom_call.1} parent=27 // pred_check_branch
          %346 = sbr.rel (%p344) target = $region40
        $region39: #{tpu_custom_call.1} parent=27 // pred_region
          %s348 = ssub.s32 256, 256
          %349 = vsyncadd %s335, %s348
          %s350 = smul.addr %s29, 4
          %s351 = sadd.s32 %s30, %s350
          %s352 = smul.addr %s351, 64
          %s353 = scalar_lea.hbm %s2, %s352
          %s354 = sshll.u32 %s338, 4
          %s355 = int_to_ptr.vmem [resolvable:$true] %s354
          %360 = dma.vmem_to_hbm [thread:$0]  %s355, 256, %s353, %s335, 64, 64, 4
        $region40: #{tpu_custom_call.1} parent=27 // pred_fallthru
          _
        // Predicated region
        $region41: #{tpu_custom_call.1} parent=27 // pred_check
          %p361 = pneg %p134
        $region42: #{tpu_custom_call.1} parent=27 // pred_check_branch
          %363 = sbr.rel (%p361) target = $region44
        $region43: #{tpu_custom_call.1} parent=27 // pred_region
          %s365 = ssub.s32 256, 256
          %366 = vsyncadd %s340, %s365
          %s367 = smul.addr %s29, 4
          %s368 = sadd.s32 %s30, %s367
          %s369 = smul.addr %s368, 64
          %s370 = scalar_lea.hbm %s3, %s369
          %s371 = sshll.u32 %s343, 4
          %s372 = int_to_ptr.vmem [resolvable:$true] %s371
          %377 = dma.vmem_to_hbm [thread:$0]  %s372, 256, %s370, %s340, 64, 64, 4
        $region44: #{tpu_custom_call.1} parent=27 // pred_fallthru
          _
      $region28: #{tpu_custom_call.1} parent=5 // pred_fallthru
        _
      %p378 = scmp.le.s32.totalorder 2, %s20
      // Predicated region
      $region45: #{tpu_custom_call.1} parent=5 // pred_check
        %p379 = pneg %p378
      $region46: #{tpu_custom_call.1} parent=5 // pred_check_branch
        %381 = sbr.rel (%p379) target = $region48
      $region47: #{tpu_custom_call.1} parent=5 // pred_region
        %s382 = ssub.s32 %s20, 2
        // Predicated region
        $region49: #{tpu_custom_call.1} parent=47 // pred_check
          %p383 = pneg %p112
        $region50: #{tpu_custom_call.1} parent=47 // pred_check_branch
          %385 = sbr.rel (%p383) target = $region52
        $region51: #{tpu_custom_call.1} parent=47 // pred_region
          %s386 = sand.u32 %s97, 1
          %s387 = scalar_lea.sflag [#allocation4], %s386
          %s388 = sand.u32 %s97, 1
          %s389 = smul.addr %s388, 16
          %s390 = scalar_lea.vmem [#allocation7], %s389
          %391 = dma.done %s387, 256
        $region52: #{tpu_custom_call.1} parent=47 // pred_fallthru
          _
        // Predicated region
        $region53: #{tpu_custom_call.1} parent=47 // pred_check
          %p392 = pneg %p140
        $region54: #{tpu_custom_call.1} parent=47 // pred_check_branch
          %394 = sbr.rel (%p392) target = $region56
        $region55: #{tpu_custom_call.1} parent=47 // pred_region
          %s395 = sand.u32 %s125, 1
          %s396 = scalar_lea.sflag [#allocation9], %s395
          %s397 = sand.u32 %s125, 1
          %s398 = smul.addr %s397, 16
          %s399 = scalar_lea.vmem [#allocation8], %s398
          %400 = dma.done %s396, 256
        $region56: #{tpu_custom_call.1} parent=47 // pred_fallthru
          _
      $region48: #{tpu_custom_call.1} parent=5 // pred_fallthru
        _
    $region6: #{tpu_custom_call.1} parent=1 // loop_footer
      %s24 = sadd.s32 1, %s20
    $region7: #{tpu_custom_call.1} parent=1 // loop_footer_branch
      %19 = sbr.rel target = $region3
    $region8: #{tpu_custom_call.1} parent=1 // loop_exit
      _
    %401 = vsyncpa [#allocation3], 1
    %s402 = scalar_lea.sflag [#allocation3], 1
    %403 = vsyncpa %s402, 1
    %404 = vsyncpa [#allocation6], 1
    %405 = vsyncpa [#allocation4], 1
    %s406 = scalar_lea.sflag [#allocation4], 1
    %407 = vsyncpa %s406, 1
    %408 = vsyncpa [#allocation9], 1
    %s409 = scalar_lea.sflag [#allocation9], 1
    %410 = vsyncpa %s409, 1

</llo_original>
